<compile_context>
chip_gen: v5e
topology: v5e:2x2
jax: 0.10.0
libtpu: 0.0.40
codegen_flags: <defaults>
</compile_context>

<pallas_src>
import jax
import jax.numpy as jnp
from jax import lax
from jax.experimental import pallas as pl
from jax.experimental.pallas import tpu as pltpu


# --------------------------------- kernel ----------------------------------

def embedding_kernel(idx_ref, table_ref, out_ref):
    # idx_ref  : (1, T, 1) int32   -- position indices for this batch element
    # table_ref: (N, E)    float32 -- full embedding table (resident in VMEM)
    # out_ref  : (1, T, E) float32
    idx = idx_ref[0]                      # (T, 1) int32, indices on sublanes
    table = table_ref[...]                # (N, E)
    T = idx.shape[0]
    N = table.shape[0]

    # One-hot row-select, then a single MXU matmul does the whole gather.
    # (hoisted once per block; no per-row loops or narrow-lane slices)
    pos = lax.broadcasted_iota(jnp.int32, (T, N), 1)          # (T, N)
    onehot = (idx == pos).astype(table.dtype)                 # (T, N)
    gathered = jnp.dot(onehot, table,
                       preferred_element_type=jnp.float32)    # (T, E)

    out_ref[0] = gathered.astype(out_ref.dtype)


# -------------------------------- wrapper -----------------------------------

def learnable_position_embedding(x_idx, table):
    """x_idx: (B, T) integer position ids; table: (ctx_length, embed_size)."""
    B, T = x_idx.shape
    N, E = table.shape

    # Lay the index vector on sublanes: (B, T, 1) so the kernel sees (T, 1)
    # without an in-kernel lane->sublane relayout.
    idx3 = x_idx.astype(jnp.int32).reshape(B, T, 1)

    return pl.pallas_call(
        embedding_kernel,
        out_shape=jax.ShapeDtypeStruct((B, T, E), table.dtype),
        grid_spec=pltpu.PrefetchScalarGridSpec(
            num_scalar_prefetch=0,
            grid=(B,),
            in_specs=[
                pl.BlockSpec((1, T, 1), lambda b: (b, 0, 0)),   # indices
                pl.BlockSpec((N, E), lambda b: (0, 0)),         # full table
            ],
            out_specs=pl.BlockSpec((1, T, E), lambda b: (b, 0, 0)),
        ),
        compiler_params=pltpu.CompilerParams(
            dimension_semantics=("parallel",)),   # 2 TCs on v7x; cheap loop on v5e/v6e
    )(idx3, table)


# --------------------------- pure-JAX reference ------------------------------

def learnable_position_embedding_reference(x_idx, table):
    return jnp.take(table, x_idx, axis=0)


# ----------------------------------- main ------------------------------------

if __name__ == "__main__":
    B, T = 2, 8                  # batch, sequence of position ids
    ctx_length, embed_size = 16, 32

    key = jax.random.PRNGKey(0)
    k_idx, k_tab = jax.random.split(key)

    x = jax.random.randint(k_idx, (B, T), 0, ctx_length, dtype=jnp.int32)
    table = jax.random.normal(k_tab, (ctx_length, embed_size), jnp.float32)

    out = learnable_position_embedding(x, table)
    out = jax.block_until_ready(out)

    ref = learnable_position_embedding_reference(x, table)
    assert out.shape == (B, T, embed_size)
    assert jnp.allclose(out, ref, atol=1e-6, rtol=1e-6), (
        float(jnp.max(jnp.abs(out - ref))))

    print("KERNEL_OK")
</pallas_src>

<mosaic_0001>
module attributes {stable_mosaic.version = 11 : i64} {
  func.func @embedding_kernel(%arg0: i32, %arg1: memref<1x8x1xi32, #tpu.memory_space<vmem>>, %arg2: memref<16x32xf32, #tpu.memory_space<vmem>>, %arg3: memref<1x8x32xf32, #tpu.memory_space<vmem>>) attributes {dimension_semantics = [#tpu.dimension_semantics<parallel>], iteration_bounds = array<i64: 2>, scalar_prefetch = 0 : i64, scratch_operands = 0 : i64, tpu.core_type = #tpu.core_type<tc>, window_params = [{transform_indices = @transform_0, window_bounds = array<i64: 1, 8, 1>}, {pipeline_mode = #tpu.pipeline_mode<synchronous>, transform_indices = @transform_1, window_bounds = array<i64: 16, 32>}, {transform_indices = @transform_2, window_bounds = array<i64: 1, 8, 32>}]} {
    %c0 = arith.constant 0 : index
    %c0_0 = arith.constant 0 : index
    %c0_1 = arith.constant 0 : index
    %0 = vector.load %arg1[%c0, %c0_0, %c0_1] : memref<1x8x1xi32, #tpu.memory_space<vmem>>, vector<1x8x1xi32>
    %1 = vector.shape_cast %0 : vector<1x8x1xi32> to vector<8x1xi32>
    %c0_2 = arith.constant 0 : index
    %c0_3 = arith.constant 0 : index
    %2 = vector.load %arg2[%c0_2, %c0_3] : memref<16x32xf32, #tpu.memory_space<vmem>>, vector<16x32xf32>
    %3 = tpu.iota {dimensions = array<i32: 1>} : vector<8x16xi32>
    %4 = vector.broadcast %1 : vector<8x1xi32> to vector<8x16xi32>
    %5 = arith.cmpi eq, %4, %3 : vector<8x16xi32>
    %6 = arith.extui %5 : vector<8x16xi1> to vector<8x16xi32>
    %7 = arith.sitofp %6 : vector<8x16xi32> to vector<8x16xf32>
    %cst = arith.constant dense<0.000000e+00> : vector<8x32xf32>
    %8 = tpu.matmul %7, %2, %cst {dimension_numbers = #tpu.dot_dimension_numbers<[1], [0], [0], [1], [0, 0, 1, 1], [], []>} : vector<8x16xf32>, vector<16x32xf32>, vector<8x32xf32> -> vector<8x32xf32>
    %c0_4 = arith.constant 0 : index
    %c0_5 = arith.constant 0 : index
    %c0_6 = arith.constant 0 : index
    %9 = vector.load %arg3[%c0_4, %c0_5, %c0_6] : memref<1x8x32xf32, #tpu.memory_space<vmem>>, vector<1x8x32xf32>
    %10 = vector.shape_cast %9 : vector<1x8x32xf32> to vector<8x32xf32>
    %11 = vector.shape_cast %8 : vector<8x32xf32> to vector<1x8x32xf32>
    tpu.vector_store %arg3[%c0_4, %c0_5, %c0_6], %11 {strides = array<i32>} : memref<1x8x32xf32, #tpu.memory_space<vmem>>, vector<1x8x32xf32>,
    return
  }
  func.func @transform_0(%arg0: i32) -> (i32, i32, i32) {
    %c0_i32 = arith.constant 0 : i32
    %c0_i32_0 = arith.constant 0 : i32
    %c0_i32_1 = arith.constant 0 : i32
    return %arg0, %c0_i32, %c0_i32_0 : i32, i32, i32
  }
  func.func @transform_1(%arg0: i32) -> (i32, i32) {
    %c0_i32 = arith.constant 0 : i32
    %c0_i32_0 = arith.constant 0 : i32
    %c0_i32_1 = arith.constant 0 : i32
    return %c0_i32, %c0_i32_0 : i32, i32
  }
  func.func @transform_2(%arg0: i32) -> (i32, i32, i32) {
    %c0_i32 = arith.constant 0 : i32
    %c0_i32_0 = arith.constant 0 : i32
    %c0_i32_1 = arith.constant 0 : i32
    return %arg0, %c0_i32, %c0_i32_0 : i32, i32, i32
  }
}

</mosaic_0001>

<llo_original>
// kernel: tpu_custom_call.1
$region0: #{tpu_custom_call.1}
  #allocation0 [shape = 'u32[]', space=smem, size = 0x4, offset = 0x4, fixed_abs, tag = 'smem constant byte address 0x4 - core index']
  #allocation1 [shape = 'u32[72,128]{1,0:T(1,128)}', space=vmem, size = 0x9000, scoped, tag = 'internal scratch']
  %s0 = inlined_call_operand.vmem [shape: s32[2,8,1], index: 0, kind: input, shape index: {}]
  %s1 = inlined_call_operand.vmem [shape: f32[16,32], index: 1, kind: input, shape index: {}]
  %s2 = inlined_call_operand.hbm [shape: f32[2,8,32], index: 2, kind: output, shape index: {}]
  %s3 = sld [smem:[#allocation0]]
  $region41: #{tpu_custom_call.1} parent=0
    _
  %s5 = ssub.s32 1, %s3
  %s6 = scalar_select 0, %s5, %s3
  $region1: #{tpu_custom_call.1} parent=0
    #allocation2 [shape = 'u8[8192]{0}', space=vmem, size = 0x2000, scoped, tag = 'output window, operand 0']
    #allocation3 [shape = 's32[2]{0}', space=sflag, size = 0x8, scoped, tag = 'scoped memory for tpu_custom_call.1']
    %7 = vsyncpa [#allocation3], 0
    %s8 = scalar_lea.sflag [#allocation3], 1
    %9 = vsyncpa %s8, 0
    loop: start=0, step=1, limit=4
    $region2: #{tpu_custom_call.1} parent=1 // loop_pre_header
      _
    $region3: #{tpu_custom_call.1} parent=1 // loop_header
      %s11 = sphi 0, %s15
      %p12 = scmp.ge.s32.totalorder %s11, 4
      %s21 = sphi 0, %s23
      %s24 = sphi 0, %s21
      %s25 = sphi 0, %s24
      %s41 = sphi 0, %s25
      %s45 = sphi 0, %s45
      %s47 = sphi 0, %s45
      %s48 = sphi 0, %s47
      %s62 = sphi 0, %s48
      %s68 = sphi 0, %s70
      %s71 = sphi 0, %s68
      %s72 = sphi 0, %s71
      %s88 = sphi 0, %s72
    $region4: #{tpu_custom_call.1} parent=1 // loop_header_branch
      %14 = sbr.rel (%p12) target = $region8
    $region5: #{tpu_custom_call.1} parent=1 // loop_body
      %s16 = ssub.s32 %s11, 1
      %s17 = ssub.s32 %s11, 2
      %s18 = sadd.s32 %s11, 1
      %s19 = ssub.s32 %s11, %s18
      %p20 = scmp.eq.s32.totalorder %s19, 0
      %s22 = sadd.s32 %s21, 1
      %s23 = scalar_select %p20, %s21, %s22
      %p26 = pneg %p20
      %p27 = scmp.eq.s32.totalorder %s11, 1
      %p28 = por %p26, %p27
      %p29 = scmp.ne.s32.totalorder %s21, %s24
      %p30 = scmp.eq.s32.totalorder %s11, 0
      %p31 = por %p29, %p30
      %p32 = scmp.ne.s32.totalorder %s21, %s24
      %p33 = scmp.eq.s32.totalorder %s16, 1
      %p34 = por %p32, %p33
      %p35 = scmp.ne.s32.totalorder %s24, %s25
      %p36 = scmp.eq.s32.totalorder %s16, 0
      %p37 = por %p35, %p36
      %p38 = scmp.ne.s32.totalorder %s24, %s25
      %p39 = scmp.eq.s32.totalorder %s17, 1
      %p40 = por %p38, %p39
      %p42 = scmp.ne.s32.totalorder %s25, %s41
      %p43 = scmp.eq.s32.totalorder %s17, 0
      %p44 = por %p42, %p43
      %s46 = sadd.s32 %s45, 1
      %p49 = scmp.eq.s32.totalorder %s11, 1
      %p50 = scmp.ne.s32.totalorder %s45, %s47
      %p51 = scmp.eq.s32.totalorder %s11, 0
      %p52 = por %p50, %p51
      %p53 = scmp.ne.s32.totalorder %s45, %s47
      %p54 = scmp.eq.s32.totalorder %s16, 1
      %p55 = por %p53, %p54
      %p56 = scmp.ne.s32.totalorder %s47, %s48
      %p57 = scmp.eq.s32.totalorder %s16, 0
      %p58 = por %p56, %p57
      %p59 = scmp.ne.s32.totalorder %s47, %s48
      %p60 = scmp.eq.s32.totalorder %s17, 1
      %p61 = por %p59, %p60
      %p63 = scmp.ne.s32.totalorder %s48, %s62
      %p64 = scmp.eq.s32.totalorder %s17, 0
      %p65 = por %p63, %p64
      %s66 = ssub.s32 %s11, %s18
      %p67 = scmp.eq.s32.totalorder %s66, 0
      %s69 = sadd.s32 %s68, 1
      %s70 = scalar_select %p67, %s68, %s69
      %p73 = pneg %p67
      %p74 = scmp.eq.s32.totalorder %s11, 1
      %p75 = por %p73, %p74
      %p76 = scmp.ne.s32.totalorder %s68, %s71
      %p77 = scmp.eq.s32.totalorder %s11, 0
      %p78 = por %p76, %p77
      %p79 = scmp.ne.s32.totalorder %s68, %s71
      %p80 = scmp.eq.s32.totalorder %s16, 1
      %p81 = por %p79, %p80
      %p82 = scmp.ne.s32.totalorder %s71, %s72
      %p83 = scmp.eq.s32.totalorder %s16, 0
      %p84 = por %p82, %p83
      %p85 = scmp.ne.s32.totalorder %s71, %s72
      %p86 = scmp.eq.s32.totalorder %s17, 1
      %p87 = por %p85, %p86
      %p89 = scmp.ne.s32.totalorder %s72, %s88
      %p90 = scmp.eq.s32.totalorder %s17, 0
      %p91 = por %p89, %p90
      %p92 = scmp.le.s32.totalorder 1, %s11
      %p93 = scmp.lt.s32.totalorder %s11, 3
      %p94 = pnand %p92, %p93
      %p95 = pneg %p94
      // Predicated region
      $region9: #{tpu_custom_call.1} parent=5 // pred_check
        _
      $region10: #{tpu_custom_call.1} parent=5 // pred_check_branch
        %97 = sbr.rel (%p94) target = $region12
      $region11: #{tpu_custom_call.1} parent=5 // pred_region
        %s98 = ssub.s32 %s11, 1
        // Predicated region
        $region13: #{tpu_custom_call.1} parent=11 // pred_check
          %p99 = pneg %p58
        $region14: #{tpu_custom_call.1} parent=11 // pred_check_branch
          %101 = sbr.rel (%p99) target = $region16
        $region15: #{tpu_custom_call.1} parent=11 // pred_region
          _
        $region16: #{tpu_custom_call.1} parent=11 // pred_fallthru
          _
      $region12: #{tpu_custom_call.1} parent=5 // pred_fallthru
        _
      %p102 = scmp.lt.s32.totalorder %s11, 2
      // Predicated region
      $region17: #{tpu_custom_call.1} parent=5 // pred_check
        %p103 = pneg %p102
      $region18: #{tpu_custom_call.1} parent=5 // pred_check_branch
        %105 = sbr.rel (%p103) target = $region20
      $region19: #{tpu_custom_call.1} parent=5 // pred_region
        // Predicated region
        $region21: #{tpu_custom_call.1} parent=19 // pred_check
          %p106 = pneg %p31
        $region22: #{tpu_custom_call.1} parent=19 // pred_check_branch
          %108 = sbr.rel (%p106) target = $region24
        $region23: #{tpu_custom_call.1} parent=19 // pred_region
          %p109 = scmp.lt.s32.totalorder %s11, 1
          %s110 = scalar_select %p109, %s11, 1
          %s111 = smul.addr %s110, 8
          %s112 = scalar_lea.vmem %s0, %s111
        $region24: #{tpu_custom_call.1} parent=19 // pred_fallthru
          _
      $region20: #{tpu_custom_call.1} parent=5 // pred_fallthru
        _
      %p113 = scmp.le.s32.totalorder 1, %s11
      %p114 = scmp.lt.s32.totalorder %s11, 3
      %p115 = pnand %p113, %p114
      %p116 = pneg %p115
      // Predicated region
      $region25: #{tpu_custom_call.1} parent=5 // pred_check
        _
      $region26: #{tpu_custom_call.1} parent=5 // pred_check_branch
        %118 = sbr.rel (%p115) target = $region28
      $region27: #{tpu_custom_call.1} parent=5 // pred_region
        %s119 = ssub.s32 %s11, 1
        %p120 = scmp.lt.s32.totalorder %s16, 1
        %s121 = scalar_select %p120, %s16, 1
        %s122 = smul.addr %s121, 8
        %s123 = scalar_lea.vmem %s0, %s122
        %p124 = pneg %p37
        %p125 = pneg %p34
        %p126 = pneg %p58
        %p127 = pneg %p55
        %p128 = pneg %p84
        %p129 = pneg %p81
        %s130 = sand.u32 %s71, 1
        %s131 = scalar_lea.sflag [#allocation3], %s130
        %s132 = sand.u32 %s71, 1
        %s133 = smul.addr %s132, 8
        %s134 = scalar_lea.vmem [#allocation2], %s133
        %p135 = scmp.lt.s32.totalorder %s16, 1
        %s136 = scalar_select %p135, %s16, 1
        %s137 = smul.addr %s136, 8
        %s138 = scalar_lea.vmem %s0, %s137
        %v139 = vld [vmem:[%s138] sm:$0xff]
        %v140 = vld [vmem:[%s1] sm:$0xff]
        %v141 = vld [vmem:[%s1 + $0x8] sm:$0xff]
        %v142 = vlaneseq
        %v143 = vand.u32 %v142, 127
        %144 = vset.pattern.permute.xlu0 0
        %145 = vperm.xlu0 %144, %v139
        %v146 = vpop.permute.xlu0 %145
        %vm147 = vcmp.eq.s32.totalorder %v146, %v143
        %v148 = vsel %vm147, 1, 0
        %v149 = vcvt.s32.f32 %v148
        %vm150 = vcmask 130048
        %v152 = vsel %vm150, %v149, 0
        %154 = vmatpush.msra.mxu0 0.0
        %155 = vmatpush.msra.mxu0 0.0
        %156 = vmatpush.msra.mxu0 0.0
        %157 = vmatpush.msra.mxu0 0.0
        %158 = vmatpush.msra.mxu0 0.0
        %159 = vmatpush.msra.mxu0 0.0
        %160 = vmatpush.msra.mxu0 0.0
        %161 = vmatpush.msra.mxu0 0.0
        %162 = vmatpush.msra.mxu0 0.0
        %163 = vmatpush.msra.mxu0 0.0
        %164 = vmatpush.msra.mxu0 0.0
        %165 = vmatpush.msra.mxu0 0.0
        %166 = vmatpush.msra.mxu0 0.0
        %167 = vmatpush.msra.mxu0 0.0
        %168 = vmatpush.msra.mxu0 %v141
        %169 = vmatpush.msra.mxu0 %v140
        %170 = vmatmul.f32.gmra.mxu0 %v152
        %v171 = vpop.f32.mrf.mxu0
        %v172 = vadd.f32 0.0, %v171
        %173 = vdwg.mxu0
        %vm174 = vcmask 261120
        %175 = vst.msk [vmem:[%s134] sm:$0xff] %vm174, %v172
        %s176 = sand.u32 %s71, 1
        %s177 = scalar_lea.sflag [#allocation3], %s176
        %s178 = sand.u32 %s71, 1
        %s179 = smul.addr %s178, 8
        %s180 = scalar_lea.vmem [#allocation2], %s179
        // Predicated region
        $region29: #{tpu_custom_call.1} parent=27 // pred_check
          %p181 = pneg %p81
        $region30: #{tpu_custom_call.1} parent=27 // pred_check_branch
          %183 = sbr.rel (%p181) target = $region32
        $region31: #{tpu_custom_call.1} parent=27 // pred_region
          %185 = vsyncadd %s177, 0
          %s186 = smul.addr %s16, 8
          %s187 = scalar_lea.hbm %s2, %s186
          %s189 = sshll.u32 %s180, 4
          %s190 = int_to_ptr.vmem [resolvable:$true] %s189
          %s191 = sshll.u32 %s187, 4
          %s192 = int_to_ptr.hbm [resolvable:$true] %s191
          %194 = dma.vmem_to_hbm [thread:$0]  %s190, 128, %s192, %s177
        $region32: #{tpu_custom_call.1} parent=27 // pred_fallthru
          _
      $region28: #{tpu_custom_call.1} parent=5 // pred_fallthru
        _
      %p195 = scmp.le.s32.totalorder 2, %s11
      // Predicated region
      $region33: #{tpu_custom_call.1} parent=5 // pred_check
        %p196 = pneg %p195
      $region34: #{tpu_custom_call.1} parent=5 // pred_check_branch
        %198 = sbr.rel (%p196) target = $region36
      $region35: #{tpu_custom_call.1} parent=5 // pred_region
        %s199 = ssub.s32 %s11, 2
        // Predicated region
        $region37: #{tpu_custom_call.1} parent=35 // pred_check
          %p200 = pneg %p87
        $region38: #{tpu_custom_call.1} parent=35 // pred_check_branch
          %202 = sbr.rel (%p200) target = $region40
        $region39: #{tpu_custom_call.1} parent=35 // pred_region
          %s203 = sand.u32 %s72, 1
          %s204 = scalar_lea.sflag [#allocation3], %s203
          %s205 = sand.u32 %s72, 1
          %s206 = smul.addr %s205, 8
          %s207 = scalar_lea.vmem [#allocation2], %s206
          %209 = dma.done %s204, 128
        $region40: #{tpu_custom_call.1} parent=35 // pred_fallthru
          _
      $region36: #{tpu_custom_call.1} parent=5 // pred_fallthru
        _
    $region6: #{tpu_custom_call.1} parent=1 // loop_footer
      %s15 = sadd.s32 1, %s11
    $region7: #{tpu_custom_call.1} parent=1 // loop_footer_branch
      %10 = sbr.rel target = $region3
    $region8: #{tpu_custom_call.1} parent=1 // loop_exit
      _
    %210 = vsyncpa [#allocation3], 1
    %s211 = scalar_lea.sflag [#allocation3], 1
    %212 = vsyncpa %s211, 1

</llo_original>
